<compile_context>
chip_gen: v6e
topology: v6e:2x2x1
jax: 0.10.0
libtpu: 0.0.40
codegen_flags: <defaults>
</compile_context>

<pallas_src>
import functools

import jax
import jax.numpy as jnp
from jax import lax
from jax.experimental import pallas as pl
from jax.experimental.pallas import tpu as pltpu

EPS = 1e-5

_CPARAMS = pltpu.CompilerParams(
    dimension_semantics=("parallel",),
    vmem_limit_bytes=48 * 1024 * 1024,   # above 16/32 MiB defaults, < v7x 64 MiB
)


def _pick_row_tile(m, target):
    """Largest 'nice' row tile that divides m (keeps BN partial sums exact)."""
    for t in (target, 1024, 512, 256, 128, 64, 32, 16, 8):
        if t <= m and m % t == 0:
            return t
    return m


def _bn_scale_bias(part_sum, part_sumsq, count, gamma, beta, eps=EPS):
    """Fold training-mode BatchNorm (batch stats, biased var) into scale/bias."""
    s = jnp.sum(part_sum, axis=0)        # (1, C)
    q = jnp.sum(part_sumsq, axis=0)      # (1, C)
    mean = s / count
    var = jnp.maximum(q / count - mean * mean, 0.0)
    scale = gamma * lax.rsqrt(var + eps)
    bias = beta - mean * scale
    return scale, bias


# ---------------------------------------------------------------------------
# Pass 1: conv1 (1x1) matmul; emit raw output + per-tile BN1 partial stats.
# ---------------------------------------------------------------------------
def _conv1x1_stats_kernel(x_ref, w_ref, y_ref, s_ref, q_ref):
    acc = jnp.dot(x_ref[...], w_ref[...], preferred_element_type=jnp.float32)
    y_ref[...] = acc.astype(y_ref.dtype)
    s_ref[...] = jnp.sum(acc, axis=0, keepdims=True).reshape(s_ref.shape)
    q_ref[...] = jnp.sum(acc * acc, axis=0, keepdims=True).reshape(q_ref.shape)


# ---------------------------------------------------------------------------
# Pass 2 (per image): BN1+ReLU (folded FMA) -> zero-padded VMEM scratch ->
#   3x3 conv as 9 MXU taps read from the scratch ref -> raw conv2 output +
#   per-image BN2 partial stats.
# ---------------------------------------------------------------------------
def _bn_relu_conv3x3_stats_kernel(y1_ref, sc_ref, bi_ref, w_ref,
                                  y2_ref, s_ref, q_ref, pad_ref,
                                  *, H, W, dilation):
    d = dilation
    cin = y1_ref.shape[-1]
    cout = w_ref.shape[-1]
    # BN1 + ReLU as a single per-channel FMA (stats folded outside the kernel).
    h = jnp.maximum(
        y1_ref[0].astype(jnp.float32) * sc_ref[...] + bi_ref[...], 0.0)
    # Padding must be zero AFTER BN+ReLU, so pad in VMEM scratch (f32).
    pad_ref[...] = jnp.zeros_like(pad_ref)
    pad_ref[d:d + H, d:d + W, :] = h
    # 3x3 conv = 9 shifted 1x1 convs; each tap read directly from the scratch
    # ref with static offsets and accumulated in f32 on the MXU.
    acc = jnp.zeros((H * W, cout), jnp.float32)
    for kh in range(3):
        for kw in range(3):
            tap = pad_ref[kh * d:kh * d + H, kw * d:kw * d + W, :]
            tap2d = tap.reshape(H * W, cin).astype(w_ref.dtype)
            acc = acc + jnp.dot(tap2d, w_ref[kh * 3 + kw],
                                preferred_element_type=jnp.float32)
    y2_ref[...] = acc.astype(y2_ref.dtype).reshape(y2_ref.shape)
    s_ref[...] = jnp.sum(acc, axis=0, keepdims=True).reshape(s_ref.shape)
    q_ref[...] = jnp.sum(acc * acc, axis=0, keepdims=True).reshape(q_ref.shape)


# ---------------------------------------------------------------------------
# Pass 3: BN2+ReLU -> conv3 (1x1) -> ONLY per-tile BN3 partial stats.
# (conv3 output is never written to HBM; it is recomputed in pass 4.)
# ---------------------------------------------------------------------------
def _bn_relu_conv1x1_stats_kernel(y2_ref, sc_ref, bi_ref, w_ref, s_ref, q_ref):
    h = jnp.maximum(
        y2_ref[...].astype(jnp.float32) * sc_ref[...] + bi_ref[...], 0.0)
    acc = jnp.dot(h.astype(w_ref.dtype), w_ref[...],
                  preferred_element_type=jnp.float32)
    s_ref[...] = jnp.sum(acc, axis=0, keepdims=True).reshape(s_ref.shape)
    q_ref[...] = jnp.sum(acc * acc, axis=0, keepdims=True).reshape(q_ref.shape)


# ---------------------------------------------------------------------------
# Pass 4: BN2+ReLU -> conv3 (recomputed) -> BN3 + residual add + ReLU.
# ---------------------------------------------------------------------------
def _bn_relu_conv1x1_bn_add_relu_kernel(y2_ref, sc2_ref, bi2_ref, w_ref,
                                        sc3_ref, bi3_ref, res_ref, o_ref):
    h = jnp.maximum(
        y2_ref[...].astype(jnp.float32) * sc2_ref[...] + bi2_ref[...], 0.0)
    acc = jnp.dot(h.astype(w_ref.dtype), w_ref[...],
                  preferred_element_type=jnp.float32)
    y = acc * sc3_ref[...] + bi3_ref[...] + res_ref[...].astype(jnp.float32)
    o_ref[...] = jnp.maximum(y, 0.0).astype(o_ref.dtype)


# ---------------------------------------------------------------------------
# Wrapper
# ---------------------------------------------------------------------------
def bottleneck_forward(x_nchw, params, *, dilation=1,
                       matmul_dtype=jnp.bfloat16, row_tile=512):
    """Bottleneck forward (train-mode BN, identity shortcut). NCHW f32 I/O."""
    w1, g1, b1, w2, g2, b2, w3, g3, b3 = params
    N, cin, H, W = x_nchw.shape
    planes = w1.shape[1]
    cout = 4 * planes
    assert cin == cout, "identity shortcut needs in_planes == 4*planes"
    d = dilation
    M = N * H * W
    tm = _pick_row_tile(M, row_tile)
    g_m = M // tm
    mm = matmul_dtype

    x = jnp.transpose(x_nchw, (0, 2, 3, 1)).astype(jnp.float32)   # NHWC
    x2d = x.reshape(M, cin)

    def stats_out(n_blk, c):
        return (pl.BlockSpec((1, 1, c), lambda i: (i, 0, 0)),
                jax.ShapeDtypeStruct((n_blk, 1, c), jnp.float32))

    # ---- pass 1: conv1 + BN1 partial stats (grid over M-tiles) -------------
    s1_spec, s1_shape = stats_out(g_m, planes)
    y1, s1, q1 = pl.pallas_call(
        _conv1x1_stats_kernel,
        grid=(g_m,),
        in_specs=[pl.BlockSpec((tm, cin), lambda i: (i, 0)),
                  pl.BlockSpec((cin, planes), lambda i: (0, 0))],
        out_specs=(pl.BlockSpec((tm, planes), lambda i: (i, 0)),
                   s1_spec, s1_spec),
        out_shape=(jax.ShapeDtypeStruct((M, planes), mm), s1_shape, s1_shape),
        compiler_params=_CPARAMS,
    )(x2d.astype(mm), w1.astype(mm))
    sc1, bi1 = _bn_scale_bias(s1, q1, M, g1, b1)

    # ---- pass 2: BN1+ReLU + 3x3 conv + BN2 partial stats (grid over N) -----
    s2_spec, s2_shape = stats_out(N, planes)
    y2, s2, q2 = pl.pallas_call(
        functools.partial(_bn_relu_conv3x3_stats_kernel, H=H, W=W, dilation=d),
        grid=(N,),
        in_specs=[pl.BlockSpec((1, H, W, planes), lambda n: (n, 0, 0, 0)),
                  pl.BlockSpec((1, planes), lambda n: (0, 0)),
                  pl.BlockSpec((1, planes), lambda n: (0, 0)),
                  pl.BlockSpec((9, planes, planes), lambda n: (0, 0, 0))],
        out_specs=(pl.BlockSpec((1, H * W, planes), lambda n: (n, 0, 0)),
                   s2_spec, s2_spec),
        out_shape=(jax.ShapeDtypeStruct((N, H * W, planes), mm),
                   s2_shape, s2_shape),
        scratch_shapes=[pltpu.VMEM((H + 2 * d, W + 2 * d, planes),
                                   jnp.float32)],
        compiler_params=_CPARAMS,
    )(y1.reshape(N, H, W, planes), sc1, bi1, w2.astype(mm))
    sc2, bi2 = _bn_scale_bias(s2, q2, M, g2, b2)

    # ---- pass 3: BN2+ReLU + conv3 -> BN3 partial stats only ----------------
    y2_2d = y2.reshape(M, planes)
    w3_mm = w3.astype(mm)
    s3_spec, s3_shape = stats_out(g_m, cout)
    s3, q3 = pl.pallas_call(
        _bn_relu_conv1x1_stats_kernel,
        grid=(g_m,),
        in_specs=[pl.BlockSpec((tm, planes), lambda i: (i, 0)),
                  pl.BlockSpec((1, planes), lambda i: (0, 0)),
                  pl.BlockSpec((1, planes), lambda i: (0, 0)),
                  pl.BlockSpec((planes, cout), lambda i: (0, 0))],
        out_specs=(s3_spec, s3_spec),
        out_shape=(s3_shape, s3_shape),
        compiler_params=_CPARAMS,
    )(y2_2d, sc2, bi2, w3_mm)
    sc3, bi3 = _bn_scale_bias(s3, q3, M, g3, b3)

    # ---- pass 4: BN2+ReLU + conv3 (recompute) + BN3 + residual + ReLU ------
    out = pl.pallas_call(
        _bn_relu_conv1x1_bn_add_relu_kernel,
        grid=(g_m,),
        in_specs=[pl.BlockSpec((tm, planes), lambda i: (i, 0)),
                  pl.BlockSpec((1, planes), lambda i: (0, 0)),
                  pl.BlockSpec((1, planes), lambda i: (0, 0)),
                  pl.BlockSpec((planes, cout), lambda i: (0, 0)),
                  pl.BlockSpec((1, cout), lambda i: (0, 0)),
                  pl.BlockSpec((1, cout), lambda i: (0, 0)),
                  pl.BlockSpec((tm, cout), lambda i: (i, 0))],
        out_specs=pl.BlockSpec((tm, cout), lambda i: (i, 0)),
        out_shape=jax.ShapeDtypeStruct((M, cout), jnp.float32),
        compiler_params=_CPARAMS,
    )(y2_2d, sc2, bi2, w3_mm, sc3, bi3, x2d)

    return jnp.transpose(out.reshape(N, H, W, cout), (0, 3, 1, 2))


# ---------------- pure-JAX reference (PyTorch semantics) ----------------
def bottleneck_ref(x, params, *, dilation=1):
    w1, g1, b1, w2, g2, b2, w3, g3, b3 = params
    in_planes, planes = w1.shape

    def bn(y, g, b):
        mean = jnp.mean(y, axis=(0, 2, 3), keepdims=True)
        var = jnp.mean((y - mean) ** 2, axis=(0, 2, 3), keepdims=True)
        return ((y - mean) * lax.rsqrt(var + EPS) * g.reshape(1, -1, 1, 1)
                + b.reshape(1, -1, 1, 1))

    def conv(x, w_oihw, pad=0, dil=1):
        return lax.conv_general_dilated(
            x, w_oihw, window_strides=(1, 1),
            padding=[(pad, pad), (pad, pad)], rhs_dilation=(dil, dil),
            dimension_numbers=('NCHW', 'OIHW', 'NCHW'))

    W1 = jnp.transpose(w1, (1, 0)).reshape(planes, in_planes, 1, 1)
    W2 = jnp.transpose(w2.reshape(3, 3, planes, planes), (3, 2, 0, 1))
    W3 = jnp.transpose(w3, (1, 0)).reshape(4 * planes, planes, 1, 1)

    out = jax.nn.relu(bn(conv(x, W1), g1, b1))
    out = jax.nn.relu(bn(conv(out, W2, pad=dilation, dil=dilation), g2, b2))
    out = bn(conv(out, W3), g3, b3)
    return jax.nn.relu(out + x)


if __name__ == "__main__":
    planes = 4
    in_planes = 4 * planes            # identity shortcut: in == out channels
    N, H, W = 2, 16, 16

    key = jax.random.PRNGKey(0)
    ks = jax.random.split(key, 10)
    x = jax.random.normal(ks[0], (N, in_planes, H, W), jnp.float32)

    w1 = 0.1 * jax.random.normal(ks[1], (in_planes, planes), jnp.float32)
    g1 = 1.0 + 0.1 * jax.random.normal(ks[2], (1, planes), jnp.float32)
    b1 = 0.1 * jax.random.normal(ks[3], (1, planes), jnp.float32)

    w2 = 0.1 * jax.random.normal(ks[4], (9, planes, planes), jnp.float32)
    g2 = 1.0 + 0.1 * jax.random.normal(ks[5], (1, planes), jnp.float32)
    b2 = 0.1 * jax.random.normal(ks[6], (1, planes), jnp.float32)

    w3 = 0.1 * jax.random.normal(ks[7], (planes, 4 * planes), jnp.float32)
    g3 = 1.0 + 0.1 * jax.random.normal(ks[8], (1, 4 * planes), jnp.float32)
    b3 = 0.1 * jax.random.normal(ks[9], (1, 4 * planes), jnp.float32)

    params = (w1, g1, b1, w2, g2, b2, w3, g3, b3)

    y_ref = jax.block_until_ready(bottleneck_ref(x, params, dilation=1))

    # f32 matmul path: strict check of the tiled / two-pass-BN structure.
    # row_tile=256 forces a 2-tile M grid so the cross-tile stats path is hit.
    y32 = jax.block_until_ready(
        bottleneck_forward(x, params, dilation=1,
                           matmul_dtype=jnp.float32, row_tile=256))
    assert y32.shape == (N, in_planes, H, W)
    err32 = float(jnp.max(jnp.abs(y32 - y_ref)))
    assert err32 < 2e-3, f"f32 path mismatch vs reference: {err32}"

    # bf16 matmul / bf16 intermediates path (production config).  Looser
    # tolerance: BN re-normalizes every stage, so with only 4 channels the
    # bf16 rounding is amplified relative to the f32 reference.
    ybf = jax.block_until_ready(
        bottleneck_forward(x, params, dilation=1,
                           matmul_dtype=jnp.bfloat16, row_tile=256))
    errbf = float(jnp.max(jnp.abs(ybf - y_ref)))
    assert errbf < 7.5e-2, f"bf16 path mismatch vs reference: {errbf}"

    print("KERNEL_OK")
</pallas_src>

<mosaic_0001>
module attributes {stable_mosaic.version = 11 : i64} {
  func.func @_conv1x1_stats_kernel(%arg0: i32, %arg1: memref<256x16xf32, #tpu.memory_space<vmem>>, %arg2: memref<16x4xf32, #tpu.memory_space<vmem>>, %arg3: memref<256x4xf32, #tpu.memory_space<vmem>>, %arg4: memref<1x1x4xf32, #tpu.memory_space<vmem>>, %arg5: memref<1x1x4xf32, #tpu.memory_space<vmem>>) attributes {dimension_semantics = [#tpu.dimension_semantics<parallel>], iteration_bounds = array<i64: 2>, scalar_prefetch = 0 : i64, scratch_operands = 0 : i64, tpu.core_type = #tpu.core_type<tc>, window_params = [{transform_indices = @transform_0, window_bounds = array<i64: 256, 16>}, {pipeline_mode = #tpu.pipeline_mode<synchronous>, transform_indices = @transform_1, window_bounds = array<i64: 16, 4>}, {transform_indices = @transform_2, window_bounds = array<i64: 256, 4>}, {transform_indices = @transform_3, window_bounds = array<i64: 1, 1, 4>}, {transform_indices = @transform_4, window_bounds = array<i64: 1, 1, 4>}]} {
    %c0 = arith.constant 0 : index
    %c0_0 = arith.constant 0 : index
    %0 = vector.load %arg1[%c0, %c0_0] : memref<256x16xf32, #tpu.memory_space<vmem>>, vector<256x16xf32>
    %c0_1 = arith.constant 0 : index
    %c0_2 = arith.constant 0 : index
    %1 = vector.load %arg2[%c0_1, %c0_2] : memref<16x4xf32, #tpu.memory_space<vmem>>, vector<16x4xf32>
    %cst = arith.constant dense<0.000000e+00> : vector<256x4xf32>
    %2 = tpu.matmul %0, %1, %cst {dimension_numbers = #tpu.dot_dimension_numbers<[1], [0], [0], [1], [0, 0, 1, 1], [], []>} : vector<256x16xf32>, vector<16x4xf32>, vector<256x4xf32> -> vector<256x4xf32>
    %c0_3 = arith.constant 0 : index
    %c0_4 = arith.constant 0 : index
    %3 = vector.load %arg3[%c0_3, %c0_4] : memref<256x4xf32, #tpu.memory_space<vmem>>, vector<256x4xf32>
    tpu.vector_store %arg3[%c0_3, %c0_4], %2 {strides = array<i32>} : memref<256x4xf32, #tpu.memory_space<vmem>>, vector<256x4xf32>,
    %cst_5 = arith.constant dense<0.000000e+00> : vector<4xf32>
    %4 = vector.multi_reduction <add>, %2, %cst_5 [0] : vector<256x4xf32> to vector<4xf32>
    %5 = vector.shape_cast %4 : vector<4xf32> to vector<1x4xf32>
    %6 = vector.shape_cast %5 : vector<1x4xf32> to vector<1x1x4xf32>
    %c0_6 = arith.constant 0 : index
    %c0_7 = arith.constant 0 : index
    %c0_8 = arith.constant 0 : index
    %7 = vector.load %arg4[%c0_6, %c0_7, %c0_8] : memref<1x1x4xf32, #tpu.memory_space<vmem>>, vector<1x1x4xf32>
    tpu.vector_store %arg4[%c0_6, %c0_7, %c0_8], %6 {strides = array<i32>} : memref<1x1x4xf32, #tpu.memory_space<vmem>>, vector<1x1x4xf32>,
    %8 = arith.mulf %2, %2 : vector<256x4xf32>
    %cst_9 = arith.constant dense<0.000000e+00> : vector<4xf32>
    %9 = vector.multi_reduction <add>, %8, %cst_9 [0] : vector<256x4xf32> to vector<4xf32>
    %10 = vector.shape_cast %9 : vector<4xf32> to vector<1x4xf32>
    %11 = vector.shape_cast %10 : vector<1x4xf32> to vector<1x1x4xf32>
    %c0_10 = arith.constant 0 : index
    %c0_11 = arith.constant 0 : index
    %c0_12 = arith.constant 0 : index
    %12 = vector.load %arg5[%c0_10, %c0_11, %c0_12] : memref<1x1x4xf32, #tpu.memory_space<vmem>>, vector<1x1x4xf32>
    tpu.vector_store %arg5[%c0_10, %c0_11, %c0_12], %11 {strides = array<i32>} : memref<1x1x4xf32, #tpu.memory_space<vmem>>, vector<1x1x4xf32>,
    return
  }
  func.func @transform_0(%arg0: i32) -> (i32, i32) {
    %c0_i32 = arith.constant 0 : i32
    %c0_i32_0 = arith.constant 0 : i32
    return %arg0, %c0_i32 : i32, i32
  }
  func.func @transform_1(%arg0: i32) -> (i32, i32) {
    %c0_i32 = arith.constant 0 : i32
    %c0_i32_0 = arith.constant 0 : i32
    %c0_i32_1 = arith.constant 0 : i32
    return %c0_i32, %c0_i32_0 : i32, i32
  }
  func.func @transform_2(%arg0: i32) -> (i32, i32) {
    %c0_i32 = arith.constant 0 : i32
    %c0_i32_0 = arith.constant 0 : i32
    return %arg0, %c0_i32 : i32, i32
  }
  func.func @transform_3(%arg0: i32) -> (i32, i32, i32) {
    %c0_i32 = arith.constant 0 : i32
    %c0_i32_0 = arith.constant 0 : i32
    %c0_i32_1 = arith.constant 0 : i32
    return %arg0, %c0_i32, %c0_i32_0 : i32, i32, i32
  }
  func.func @transform_4(%arg0: i32) -> (i32, i32, i32) {
    %c0_i32 = arith.constant 0 : i32
    %c0_i32_0 = arith.constant 0 : i32
    %c0_i32_1 = arith.constant 0 : i32
    return %arg0, %c0_i32, %c0_i32_0 : i32, i32, i32
  }
}

</mosaic_0001>

<llo_original>
// kernel: tpu_custom_call.1
$region0: #{tpu_custom_call.1}
  #allocation0 [shape = 'u32[]', space=smem, size = 0x4, offset = 0x4, fixed_abs, tag = 'smem constant byte address 0x4 - core index']
  #allocation1 [shape = 'u32[144,128]{1,0:T(1,128)}', space=vmem, size = 0x12000, scoped, tag = 'internal scratch']
  %s0 = inlined_call_operand.vmem [shape: f32[512,16], index: 0, kind: input, shape index: {}]
  %s1 = inlined_call_operand.vmem [shape: f32[16,4], index: 1, kind: input, shape index: {}]
  %s2 = inlined_call_operand.vmem [shape: f32[512,4], index: 2, kind: output, shape index: {0}]
  %s3 = inlined_call_operand.hbm [shape: f32[2,1,4], index: 3, kind: output, shape index: {1}]
  %s4 = inlined_call_operand.hbm [shape: f32[2,1,4], index: 4, kind: output, shape index: {2}]
  %5 = xla_tuple %s2, %s3, %s4
  %s6 = sld [smem:[#allocation0]]
  $region57: #{tpu_custom_call.1} parent=0
    _
  %s8 = ssub.s32 1, %s6
  %s9 = scalar_select 0, %s8, %s6
  $region1: #{tpu_custom_call.1} parent=0
    #allocation2 [shape = 'u8[1024]{0}', space=vmem, size = 0x400, scoped, tag = 'output window, operand 1']
    #allocation3 [shape = 's32[2]{0}', space=sflag, size = 0x8, scoped, tag = 'scoped memory for tpu_custom_call.1']
    #allocation4 [shape = 'u8[1024]{0}', space=vmem, size = 0x400, scoped, tag = 'output window, operand 2']
    #allocation5 [shape = 's32[2]{0}', space=sflag, size = 0x8, scoped, tag = 'scoped memory for tpu_custom_call.1']
    %10 = vsyncpa [#allocation3], 0
    %s11 = scalar_lea.sflag [#allocation3], 1
    %12 = vsyncpa %s11, 0
    %13 = vsyncpa [#allocation5], 0
    %s14 = scalar_lea.sflag [#allocation5], 1
    %15 = vsyncpa %s14, 0
    loop: start=0, step=1, limit=4
    $region2: #{tpu_custom_call.1} parent=1 // loop_pre_header
      _
    $region3: #{tpu_custom_call.1} parent=1 // loop_header
      %s17 = sphi 0, %s21
      %p18 = scmp.ge.s32.totalorder %s17, 4
      %s27 = sphi 0, %s29
      %s30 = sphi 0, %s27
      %s31 = sphi 0, %s30
      %s47 = sphi 0, %s31
      %s51 = sphi 0, %s51
      %s53 = sphi 0, %s51
      %s54 = sphi 0, %s53
      %s68 = sphi 0, %s54
      %s74 = sphi 0, %s76
      %s77 = sphi 0, %s74
      %s78 = sphi 0, %s77
      %s94 = sphi 0, %s78
      %s100 = sphi 0, %s102
      %s103 = sphi 0, %s100
      %s104 = sphi 0, %s103
      %s120 = sphi 0, %s104
      %s126 = sphi 0, %s128
      %s129 = sphi 0, %s126
      %s130 = sphi 0, %s129
      %s146 = sphi 0, %s130
    $region4: #{tpu_custom_call.1} parent=1 // loop_header_branch
      %20 = sbr.rel (%p18) target = $region8
    $region5: #{tpu_custom_call.1} parent=1 // loop_body
      %s22 = ssub.s32 %s17, 1
      %s23 = ssub.s32 %s17, 2
      %s24 = sadd.s32 %s17, 1
      %s25 = ssub.s32 %s17, %s24
      %p26 = scmp.eq.s32.totalorder %s25, 0
      %s28 = sadd.s32 %s27, 1
      %s29 = scalar_select %p26, %s27, %s28
      %p32 = pneg %p26
      %p33 = scmp.eq.s32.totalorder %s17, 1
      %p34 = por %p32, %p33
      %p35 = scmp.ne.s32.totalorder %s27, %s30
      %p36 = scmp.eq.s32.totalorder %s17, 0
      %p37 = por %p35, %p36
      %p38 = scmp.ne.s32.totalorder %s27, %s30
      %p39 = scmp.eq.s32.totalorder %s22, 1
      %p40 = por %p38, %p39
      %p41 = scmp.ne.s32.totalorder %s30, %s31
      %p42 = scmp.eq.s32.totalorder %s22, 0
      %p43 = por %p41, %p42
      %p44 = scmp.ne.s32.totalorder %s30, %s31
      %p45 = scmp.eq.s32.totalorder %s23, 1
      %p46 = por %p44, %p45
      %p48 = scmp.ne.s32.totalorder %s31, %s47
      %p49 = scmp.eq.s32.totalorder %s23, 0
      %p50 = por %p48, %p49
      %s52 = sadd.s32 %s51, 1
      %p55 = scmp.eq.s32.totalorder %s17, 1
      %p56 = scmp.ne.s32.totalorder %s51, %s53
      %p57 = scmp.eq.s32.totalorder %s17, 0
      %p58 = por %p56, %p57
      %p59 = scmp.ne.s32.totalorder %s51, %s53
      %p60 = scmp.eq.s32.totalorder %s22, 1
      %p61 = por %p59, %p60
      %p62 = scmp.ne.s32.totalorder %s53, %s54
      %p63 = scmp.eq.s32.totalorder %s22, 0
      %p64 = por %p62, %p63
      %p65 = scmp.ne.s32.totalorder %s53, %s54
      %p66 = scmp.eq.s32.totalorder %s23, 1
      %p67 = por %p65, %p66
      %p69 = scmp.ne.s32.totalorder %s54, %s68
      %p70 = scmp.eq.s32.totalorder %s23, 0
      %p71 = por %p69, %p70
      %s72 = ssub.s32 %s17, %s24
      %p73 = scmp.eq.s32.totalorder %s72, 0
      %s75 = sadd.s32 %s74, 1
      %s76 = scalar_select %p73, %s74, %s75
      %p79 = pneg %p73
      %p80 = scmp.eq.s32.totalorder %s17, 1
      %p81 = por %p79, %p80
      %p82 = scmp.ne.s32.totalorder %s74, %s77
      %p83 = scmp.eq.s32.totalorder %s17, 0
      %p84 = por %p82, %p83
      %p85 = scmp.ne.s32.totalorder %s74, %s77
      %p86 = scmp.eq.s32.totalorder %s22, 1
      %p87 = por %p85, %p86
      %p88 = scmp.ne.s32.totalorder %s77, %s78
      %p89 = scmp.eq.s32.totalorder %s22, 0
      %p90 = por %p88, %p89
      %p91 = scmp.ne.s32.totalorder %s77, %s78
      %p92 = scmp.eq.s32.totalorder %s23, 1
      %p93 = por %p91, %p92
      %p95 = scmp.ne.s32.totalorder %s78, %s94
      %p96 = scmp.eq.s32.totalorder %s23, 0
      %p97 = por %p95, %p96
      %s98 = ssub.s32 %s17, %s24
      %p99 = scmp.eq.s32.totalorder %s98, 0
      %s101 = sadd.s32 %s100, 1
      %s102 = scalar_select %p99, %s100, %s101
      %p105 = pneg %p99
      %p106 = scmp.eq.s32.totalorder %s17, 1
      %p107 = por %p105, %p106
      %p108 = scmp.ne.s32.totalorder %s100, %s103
      %p109 = scmp.eq.s32.totalorder %s17, 0
      %p110 = por %p108, %p109
      %p111 = scmp.ne.s32.totalorder %s100, %s103
      %p112 = scmp.eq.s32.totalorder %s22, 1
      %p113 = por %p111, %p112
      %p114 = scmp.ne.s32.totalorder %s103, %s104
      %p115 = scmp.eq.s32.totalorder %s22, 0
      %p116 = por %p114, %p115
      %p117 = scmp.ne.s32.totalorder %s103, %s104
      %p118 = scmp.eq.s32.totalorder %s23, 1
      %p119 = por %p117, %p118
      %p121 = scmp.ne.s32.totalorder %s104, %s120
      %p122 = scmp.eq.s32.totalorder %s23, 0
      %p123 = por %p121, %p122
      %s124 = ssub.s32 %s17, %s24
      %p125 = scmp.eq.s32.totalorder %s124, 0
      %s127 = sadd.s32 %s126, 1
      %s128 = scalar_select %p125, %s126, %s127
      %p131 = pneg %p125
      %p132 = scmp.eq.s32.totalorder %s17, 1
      %p133 = por %p131, %p132
      %p134 = scmp.ne.s32.totalorder %s126, %s129
      %p135 = scmp.eq.s32.totalorder %s17, 0
      %p136 = por %p134, %p135
      %p137 = scmp.ne.s32.totalorder %s126, %s129
      %p138 = scmp.eq.s32.totalorder %s22, 1
      %p139 = por %p137, %p138
      %p140 = scmp.ne.s32.totalorder %s129, %s130
      %p141 = scmp.eq.s32.totalorder %s22, 0
      %p142 = por %p140, %p141
      %p143 = scmp.ne.s32.totalorder %s129, %s130
      %p144 = scmp.eq.s32.totalorder %s23, 1
      %p145 = por %p143, %p144
      %p147 = scmp.ne.s32.totalorder %s130, %s146
      %p148 = scmp.eq.s32.totalorder %s23, 0
      %p149 = por %p147, %p148
      %p150 = scmp.le.s32.totalorder 1, %s17
      %p151 = scmp.lt.s32.totalorder %s17, 3
      %p152 = pnand %p150, %p151
      %p153 = pneg %p152
      // Predicated region
      $region9: #{tpu_custom_call.1} parent=5 // pred_check
        _
      $region10: #{tpu_custom_call.1} parent=5 // pred_check_branch
        %155 = sbr.rel (%p152) target = $region12
      $region11: #{tpu_custom_call.1} parent=5 // pred_region
        %s156 = ssub.s32 %s17, 1
        // Predicated region
        $region13: #{tpu_custom_call.1} parent=11 // pred_check
          %p157 = pneg %p64
        $region14: #{tpu_custom_call.1} parent=11 // pred_check_branch
          %159 = sbr.rel (%p157) target = $region16
        $region15: #{tpu_custom_call.1} parent=11 // pred_region
          _
        $region16: #{tpu_custom_call.1} parent=11 // pred_fallthru
          _
      $region12: #{tpu_custom_call.1} parent=5 // pred_fallthru
        _
      %p160 = scmp.lt.s32.totalorder %s17, 2
      // Predicated region
      $region17: #{tpu_custom_call.1} parent=5 // pred_check
        %p161 = pneg %p160
      $region18: #{tpu_custom_call.1} parent=5 // pred_check_branch
        %163 = sbr.rel (%p161) target = $region20
      $region19: #{tpu_custom_call.1} parent=5 // pred_region
        // Predicated region
        $region21: #{tpu_custom_call.1} parent=19 // pred_check
          %p164 = pneg %p37
        $region22: #{tpu_custom_call.1} parent=19 // pred_check_branch
          %166 = sbr.rel (%p164) target = $region24
        $region23: #{tpu_custom_call.1} parent=19 // pred_region
          %s167 = smul.u32 32, %s17
          %p168 = scmp.lt.s32.totalorder %s167, 63
          %s169 = scalar_select %p168, %s167, 63
          %s170 = smul.addr %s169, 8
          %s171 = scalar_lea.vmem %s0, %s170
          %s172 = smul.u32 32, %s17
        $region24: #{tpu_custom_call.1} parent=19 // pred_fallthru
          _
      $region20: #{tpu_custom_call.1} parent=5 // pred_fallthru
        _
      %p173 = scmp.le.s32.totalorder 1, %s17
      %p174 = scmp.lt.s32.totalorder %s17, 3
      %p175 = pnand %p173, %p174
      %p176 = pneg %p175
      // Predicated region
      $region25: #{tpu_custom_call.1} parent=5 // pred_check
        _
      $region26: #{tpu_custom_call.1} parent=5 // pred_check_branch
        %178 = sbr.rel (%p175) target = $region28
      $region27: #{tpu_custom_call.1} parent=5 // pred_region
        %s179 = ssub.s32 %s17, 1
        %s180 = smul.u32 32, %s22
        %p181 = scmp.lt.s32.totalorder %s180, 63
        %s182 = scalar_select %p181, %s180, 63
        %s183 = smul.addr %s182, 8
        %s184 = scalar_lea.vmem %s0, %s183
        %p185 = pneg %p43
        %p186 = pneg %p40
        %p187 = pneg %p64
        %p188 = pneg %p61
        %p189 = pneg %p90
        %p190 = pneg %p87
        %s191 = smul.u32 32, %s22
        %p192 = scmp.lt.s32.totalorder %s191, 63
        %s193 = scalar_select %p192, %s191, 63
        %s194 = smul.addr %s193, 8
        %s195 = scalar_lea.vmem %s2, %s194
        %p196 = pneg %p116
        %p197 = pneg %p113
        %s198 = sand.u32 %s103, 1
        %s199 = scalar_lea.sflag [#allocation3], %s198
        %s200 = sand.u32 %s103, 1
        %s201 = scalar_lea.vmem [#allocation2], %s200
        %p202 = pneg %p142
        %p203 = pneg %p139
        %s204 = sand.u32 %s129, 1
        %s205 = scalar_lea.sflag [#allocation5], %s204
        %s206 = sand.u32 %s129, 1
        %s207 = scalar_lea.vmem [#allocation4], %s206
        %s208 = smul.u32 32, %s22
        %p209 = scmp.lt.s32.totalorder %s208, 63
        %s210 = scalar_select %p209, %s208, 63
        %s211 = smul.addr %s210, 8
        %s212 = scalar_lea.vmem %s0, %s211
        %s213 = smul.u32 32, %s22
        %s214 = smul.u32 32, %s22
        %p215 = scmp.lt.s32.totalorder %s214, 63
        %s216 = scalar_select %p215, %s214, 63
        %s217 = smul.addr %s216, 8
        %s218 = scalar_lea.vmem %s2, %s217
        %s219 = smul.u32 32, %s22
        %v220 = vld [vmem:[%s212] sm:$0xff]
        %v221 = vld [vmem:[%s212 + $0x8] sm:$0xff]
        %v222 = vld [vmem:[%s212 + $0x10] sm:$0xff]
        %v223 = vld [vmem:[%s212 + $0x18] sm:$0xff]
        %v224 = vld [vmem:[%s212 + $0x20] sm:$0xff]
        %v225 = vld [vmem:[%s212 + $0x28] sm:$0xff]
        %v226 = vld [vmem:[%s212 + $0x30] sm:$0xff]
        %v227 = vld [vmem:[%s212 + $0x38] sm:$0xff]
        %v228 = vld [vmem:[%s212 + $0x40] sm:$0xff]
        %v229 = vld [vmem:[%s212 + $0x48] sm:$0xff]
        %v230 = vld [vmem:[%s212 + $0x50] sm:$0xff]
        %v231 = vld [vmem:[%s212 + $0x58] sm:$0xff]
        %v232 = vld [vmem:[%s212 + $0x60] sm:$0xff]
        %v233 = vld [vmem:[%s212 + $0x68] sm:$0xff]
        %v234 = vld [vmem:[%s212 + $0x70] sm:$0xff]
        %v235 = vld [vmem:[%s212 + $0x78] sm:$0xff]
        %v236 = vld [vmem:[%s212 + $0x80] sm:$0xff]
        %v237 = vld [vmem:[%s212 + $0x88] sm:$0xff]
        %v238 = vld [vmem:[%s212 + $0x90] sm:$0xff]
        %v239 = vld [vmem:[%s212 + $0x98] sm:$0xff]
        %v240 = vld [vmem:[%s212 + $0xa0] sm:$0xff]
        %v241 = vld [vmem:[%s212 + $0xa8] sm:$0xff]
        %v242 = vld [vmem:[%s212 + $0xb0] sm:$0xff]
        %v243 = vld [vmem:[%s212 + $0xb8] sm:$0xff]
        %v244 = vld [vmem:[%s212 + $0xc0] sm:$0xff]
        %v245 = vld [vmem:[%s212 + $0xc8] sm:$0xff]
        %v246 = vld [vmem:[%s212 + $0xd0] sm:$0xff]
        %v247 = vld [vmem:[%s212 + $0xd8] sm:$0xff]
        %v248 = vld [vmem:[%s212 + $0xe0] sm:$0xff]
        %v249 = vld [vmem:[%s212 + $0xe8] sm:$0xff]
        %v250 = vld [vmem:[%s212 + $0xf0] sm:$0xff]
        %v251 = vld [vmem:[%s212 + $0xf8] sm:$0xff]
        %v252 = vld [vmem:[%s1] sm:$0xff]
        %v253 = vld [vmem:[%s1 + $0x8] sm:$0xff]
        %vm254 = vcmask 130048
        %v256 = vsel %vm254, %v220, 0
        %v259 = vsel %vm254, %v221, 0
        %v262 = vsel %vm254, %v222, 0
        %v265 = vsel %vm254, %v223, 0
        %v268 = vsel %vm254, %v224, 0
        %v271 = vsel %vm254, %v225, 0
        %v274 = vsel %vm254, %v226, 0
        %v277 = vsel %vm254, %v227, 0
        %v280 = vsel %vm254, %v228, 0
        %v283 = vsel %vm254, %v229, 0
        %v286 = vsel %vm254, %v230, 0
        %v289 = vsel %vm254, %v231, 0
        %v292 = vsel %vm254, %v232, 0
        %v295 = vsel %vm254, %v233, 0
        %v298 = vsel %vm254, %v234, 0
        %v301 = vsel %vm254, %v235, 0
        %v304 = vsel %vm254, %v236, 0
        %v307 = vsel %vm254, %v237, 0
        %v310 = vsel %vm254, %v238, 0
        %v313 = vsel %vm254, %v239, 0
        %v316 = vsel %vm254, %v240, 0
        %v319 = vsel %vm254, %v241, 0
        %v322 = vsel %vm254, %v242, 0
        %v325 = vsel %vm254, %v243, 0
        %v328 = vsel %vm254, %v244, 0
        %v331 = vsel %vm254, %v245, 0
        %v334 = vsel %vm254, %v246, 0
        %v337 = vsel %vm254, %v247, 0
        %v340 = vsel %vm254, %v248, 0
        %v343 = vsel %vm254, %v249, 0
        %v346 = vsel %vm254, %v250, 0
        %v349 = vsel %vm254, %v251, 0
        %351 = vmatprep.subr.mxu0 0.0
        %352 = vmatpush1.msra.mxu0 0.0
        %353 = vmatprep.subr.mxu0 0.0
        %354 = vmatpush1.msra.mxu0 0.0
        %355 = vmatprep.subr.mxu0 0.0
        %356 = vmatpush1.msra.mxu0 0.0
        %357 = vmatprep.subr.mxu0 0.0
        %358 = vmatpush1.msra.mxu0 0.0
        %359 = vmatprep.subr.mxu0 0.0
        %360 = vmatpush1.msra.mxu0 0.0
        %361 = vmatprep.subr.mxu0 0.0
        %362 = vmatpush1.msra.mxu0 0.0
        %363 = vmatprep.subr.mxu0 0.0
        %364 = vmatpush1.msra.mxu0 0.0
        %365 = vmatprep.subr.mxu0 0.0
        %366 = vmatpush1.msra.mxu0 0.0
        %367 = vmatprep.subr.mxu0 0.0
        %368 = vmatpush1.msra.mxu0 0.0
        %369 = vmatprep.subr.mxu0 0.0
        %370 = vmatpush1.msra.mxu0 0.0
        %371 = vmatprep.subr.mxu0 0.0
        %372 = vmatpush1.msra.mxu0 0.0
        %373 = vmatprep.subr.mxu0 0.0
        %374 = vmatpush1.msra.mxu0 0.0
        %375 = vmatprep.subr.mxu0 0.0
        %376 = vmatpush1.msra.mxu0 0.0
        %377 = vmatprep.subr.mxu0 0.0
        %378 = vmatpush1.msra.mxu0 0.0
        %379 = vmatprep.subr.mxu0 0.0
        %380 = vmatpush1.msra.mxu0 %v253
        %381 = vmatprep.subr.mxu0 0.0
        %382 = vmatpush1.msra.mxu0 %v252
        %383 = vmatprep.subr.mxu0 0.0
        %384 = vmatpush2.msra.mxu0 0.0
        %385 = vmatprep.subr.mxu0 0.0
        %386 = vmatpush2.msra.mxu0 0.0
        %387 = vmatprep.subr.mxu0 0.0
        %388 = vmatpush2.msra.mxu0 0.0
        %389 = vmatprep.subr.mxu0 0.0
        %390 = vmatpush2.msra.mxu0 0.0
        %391 = vmatprep.subr.mxu0 0.0
        %392 = vmatpush2.msra.mxu0 0.0
        %393 = vmatprep.subr.mxu0 0.0
        %394 = vmatpush2.msra.mxu0 0.0
        %395 = vmatprep.subr.mxu0 0.0
        %396 = vmatpush2.msra.mxu0 0.0
        %397 = vmatprep.subr.mxu0 0.0
        %398 = vmatpush2.msra.mxu0 0.0
        %399 = vmatprep.subr.mxu0 0.0
        %400 = vmatpush2.msra.mxu0 0.0
        %401 = vmatprep.subr.mxu0 0.0
        %402 = vmatpush2.msra.mxu0 0.0
        %403 = vmatprep.subr.mxu0 0.0
        %404 = vmatpush2.msra.mxu0 0.0
        %405 = vmatprep.subr.mxu0 0.0
        %406 = vmatpush2.msra.mxu0 0.0
        %407 = vmatprep.subr.mxu0 0.0
        %408 = vmatpush2.msra.mxu0 0.0
        %409 = vmatprep.subr.mxu0 0.0
        %410 = vmatpush2.msra.mxu0 0.0
        %411 = vmatprep.subr.mxu0 0.0
        %412 = vmatpush2.msra.mxu0 0.0
        %413 = vmatprep.subr.mxu0 0.0
        %414 = vmatpush2.msra.mxu0 0.0
        %415 = vmatprep.mubr.f32.mxu0 0.0
        %416 = vmatmul.mubr.f32.gmra.mxu0 %v256
        %v417 = vpop.f32.mrf.mxu0
        %v418 = vadd.f32 0.0, %v417
        %v419 = vpop.f32.mrf.mxu0
        %420 = vmatprep.mubr.f32.mxu0 0.0
        %421 = vmatmul.mubr.f32.gmra.mxu0 %v259
        %v422 = vpop.f32.mrf.mxu0
        %v423 = vadd.f32 0.0, %v422
        %v424 = vpop.f32.mrf.mxu0
        %425 = vmatprep.mubr.f32.mxu0 0.0
        %426 = vmatmul.mubr.f32.gmra.mxu0 %v262
        %v427 = vpop.f32.mrf.mxu0
        %v428 = vadd.f32 0.0, %v427
        %v429 = vpop.f32.mrf.mxu0
        %430 = vmatprep.mubr.f32.mxu0 0.0
        %431 = vmatmul.mubr.f32.gmra.mxu0 %v265
        %v432 = vpop.f32.mrf.mxu0
        %v433 = vadd.f32 0.0, %v432
        %v434 = vpop.f32.mrf.mxu0
        %435 = vmatprep.mubr.f32.mxu0 0.0
        %436 = vmatmul.mubr.f32.gmra.mxu0 %v268
        %v437 = vpop.f32.mrf.mxu0
        %v438 = vadd.f32 0.0, %v437
        %v439 = vpop.f32.mrf.mxu0
        %440 = vmatprep.mubr.f32.mxu0 0.0
        %441 = vmatmul.mubr.f32.gmra.mxu0 %v271
        %v442 = vpop.f32.mrf.mxu0
        %v443 = vadd.f32 0.0, %v442
        %v444 = vpop.f32.mrf.mxu0
        %445 = vmatprep.mubr.f32.mxu0 0.0
        %446 = vmatmul.mubr.f32.gmra.mxu0 %v274
        %v447 = vpop.f32.mrf.mxu0
        %v448 = vadd.f32 0.0, %v447
        %v449 = vpop.f32.mrf.mxu0
        %450 = vmatprep.mubr.f32.mxu0 0.0
        %451 = vmatmul.mubr.f32.gmra.mxu0 %v277
        %v452 = vpop.f32.mrf.mxu0
        %v453 = vadd.f32 0.0, %v452
        %v454 = vpop.f32.mrf.mxu0
        %455 = vmatprep.mubr.f32.mxu0 0.0
        %456 = vmatmul.mubr.f32.gmra.mxu0 %v280
        %v457 = vpop.f32.mrf.mxu0
        %v458 = vadd.f32 0.0, %v457
        %v459 = vpop.f32.mrf.mxu0
        %460 = vmatprep.mubr.f32.mxu0 0.0
        %461 = vmatmul.mubr.f32.gmra.mxu0 %v283
        %v462 = vpop.f32.mrf.mxu0
        %v463 = vadd.f32 0.0, %v462
        %v464 = vpop.f32.mrf.mxu0
        %465 = vmatprep.mubr.f32.mxu0 0.0
        %466 = vmatmul.mubr.f32.gmra.mxu0 %v286
        %v467 = vpop.f32.mrf.mxu0
        %v468 = vadd.f32 0.0, %v467
        %v469 = vpop.f32.mrf.mxu0
        %470 = vmatprep.mubr.f32.mxu0 0.0
        %471 = vmatmul.mubr.f32.gmra.mxu0 %v289
        %v472 = vpop.f32.mrf.mxu0
        %v473 = vadd.f32 0.0, %v472
        %v474 = vpop.f32.mrf.mxu0
        %475 = vmatprep.mubr.f32.mxu0 0.0
        %476 = vmatmul.mubr.f32.gmra.mxu0 %v292
        %v477 = vpop.f32.mrf.mxu0
        %v478 = vadd.f32 0.0, %v477
        %v479 = vpop.f32.mrf.mxu0
        %480 = vmatprep.mubr.f32.mxu0 0.0
        %481 = vmatmul.mubr.f32.gmra.mxu0 %v295
        %v482 = vpop.f32.mrf.mxu0
        %v483 = vadd.f32 0.0, %v482
        %v484 = vpop.f32.mrf.mxu0
        %485 = vmatprep.mubr.f32.mxu0 0.0
        %486 = vmatmul.mubr.f32.gmra.mxu0 %v298
        %v487 = vpop.f32.mrf.mxu0
        %v488 = vadd.f32 0.0, %v487
        %v489 = vpop.f32.mrf.mxu0
        %490 = vmatprep.mubr.f32.mxu0 0.0
        %491 = vmatmul.mubr.f32.gmra.mxu0 %v301
        %v492 = vpop.f32.mrf.mxu0
        %v493 = vadd.f32 0.0, %v492
        %v494 = vpop.f32.mrf.mxu0
        %495 = vmatprep.mubr.f32.mxu0 0.0
        %496 = vmatmul.mubr.f32.gmra.mxu0 %v304
        %v497 = vpop.f32.mrf.mxu0
        %v498 = vadd.f32 0.0, %v497
        %v499 = vpop.f32.mrf.mxu0
        %500 = vmatprep.mubr.f32.mxu0 0.0
        %501 = vmatmul.mubr.f32.gmra.mxu0 %v307
        %v502 = vpop.f32.mrf.mxu0
        %v503 = vadd.f32 0.0, %v502
        %v504 = vpop.f32.mrf.mxu0
        %505 = vmatprep.mubr.f32.mxu0 0.0
        %506 = vmatmul.mubr.f32.gmra.mxu0 %v310
        %v507 = vpop.f32.mrf.mxu0
        %v508 = vadd.f32 0.0, %v507
        %v509 = vpop.f32.mrf.mxu0
        %510 = vmatprep.mubr.f32.mxu0 0.0
        %511 = vmatmul.mubr.f32.gmra.mxu0 %v313
        %v512 = vpop.f32.mrf.mxu0
        %v513 = vadd.f32 0.0, %v512
        %v514 = vpop.f32.mrf.mxu0
        %515 = vmatprep.mubr.f32.mxu0 0.0
        %516 = vmatmul.mubr.f32.gmra.mxu0 %v316
        %v517 = vpop.f32.mrf.mxu0
        %v518 = vadd.f32 0.0, %v517
        %v519 = vpop.f32.mrf.mxu0
        %520 = vmatprep.mubr.f32.mxu0 0.0
        %521 = vmatmul.mubr.f32.gmra.mxu0 %v319
        %v522 = vpop.f32.mrf.mxu0
        %v523 = vadd.f32 0.0, %v522
        %v524 = vpop.f32.mrf.mxu0
        %525 = vmatprep.mubr.f32.mxu0 0.0
        %526 = vmatmul.mubr.f32.gmra.mxu0 %v322
        %v527 = vpop.f32.mrf.mxu0
        %v528 = vadd.f32 0.0, %v527
        %v529 = vpop.f32.mrf.mxu0
        %530 = vmatprep.mubr.f32.mxu0 0.0
        %531 = vmatmul.mubr.f32.gmra.mxu0 %v325
        %v532 = vpop.f32.mrf.mxu0
        %v533 = vadd.f32 0.0, %v532
        %v534 = vpop.f32.mrf.mxu0
        %535 = vmatprep.mubr.f32.mxu0 0.0
        %536 = vmatmul.mubr.f32.gmra.mxu0 %v328
        %v537 = vpop.f32.mrf.mxu0
        %v538 = vadd.f32 0.0, %v537
        %v539 = vpop.f32.mrf.mxu0
        %540 = vmatprep.mubr.f32.mxu0 0.0
        %541 = vmatmul.mubr.f32.gmra.mxu0 %v331
        %v542 = vpop.f32.mrf.mxu0
        %v543 = vadd.f32 0.0, %v542
        %v544 = vpop.f32.mrf.mxu0
        %545 = vmatprep.mubr.f32.mxu0 0.0
        %546 = vmatmul.mubr.f32.gmra.mxu0 %v334
        %v547 = vpop.f32.mrf.mxu0
        %v548 = vadd.f32 0.0, %v547
        %v549 = vpop.f32.mrf.mxu0
        %550 = vmatprep.mubr.f32.mxu0 0.0
        %551 = vmatmul.mubr.f32.gmra.mxu0 %v337
        %v552 = vpop.f32.mrf.mxu0
        %v553 = vadd.f32 0.0, %v552
        %v554 = vpop.f32.mrf.mxu0
        %555 = vmatprep.mubr.f32.mxu0 0.0
        %556 = vmatmul.mubr.f32.gmra.mxu0 %v340
        %v557 = vpop.f32.mrf.mxu0
        %v558 = vadd.f32 0.0, %v557
        %v559 = vpop.f32.mrf.mxu0
        %560 = vmatprep.mubr.f32.mxu0 0.0
        %561 = vmatmul.mubr.f32.gmra.mxu0 %v343
        %v562 = vpop.f32.mrf.mxu0
        %v563 = vadd.f32 0.0, %v562
        %v564 = vpop.f32.mrf.mxu0
        %565 = vmatprep.mubr.f32.mxu0 0.0
        %566 = vmatmul.mubr.f32.gmra.mxu0 %v346
        %v567 = vpop.f32.mrf.mxu0
        %v568 = vadd.f32 0.0, %v567
        %v569 = vpop.f32.mrf.mxu0
        %570 = vmatprep.mubr.f32.mxu0 0.0
        %571 = vmatmul.mubr.f32.gmra.mxu0 %v349
        %v572 = vpop.f32.mrf.mxu0
        %v573 = vadd.f32 0.0, %v572
        %v574 = vpop.f32.mrf.mxu0
        %575 = vdwg.mxu0
        %vm576 = vcmask 31744
        %577 = vst.msk [vmem:[%s218] sm:$0xff] %vm576, %v418
        %578 = vst.msk [vmem:[%s218 + $0x8] sm:$0xff] %vm576, %v423
        %579 = vst.msk [vmem:[%s218 + $0x10] sm:$0xff] %vm576, %v428
        %580 = vst.msk [vmem:[%s218 + $0x18] sm:$0xff] %vm576, %v433
        %581 = vst.msk [vmem:[%s218 + $0x20] sm:$0xff] %vm576, %v438
        %582 = vst.msk [vmem:[%s218 + $0x28] sm:$0xff] %vm576, %v443
        %583 = vst.msk [vmem:[%s218 + $0x30] sm:$0xff] %vm576, %v448
        %584 = vst.msk [vmem:[%s218 + $0x38] sm:$0xff] %vm576, %v453
        %585 = vst.msk [vmem:[%s218 + $0x40] sm:$0xff] %vm576, %v458
        %586 = vst.msk [vmem:[%s218 + $0x48] sm:$0xff] %vm576, %v463
        %587 = vst.msk [vmem:[%s218 + $0x50] sm:$0xff] %vm576, %v468
        %588 = vst.msk [vmem:[%s218 + $0x58] sm:$0xff] %vm576, %v473
        %589 = vst.msk [vmem:[%s218 + $0x60] sm:$0xff] %vm576, %v478
        %590 = vst.msk [vmem:[%s218 + $0x68] sm:$0xff] %vm576, %v483
        %591 = vst.msk [vmem:[%s218 + $0x70] sm:$0xff] %vm576, %v488
        %592 = vst.msk [vmem:[%s218 + $0x78] sm:$0xff] %vm576, %v493
        %593 = vst.msk [vmem:[%s218 + $0x80] sm:$0xff] %vm576, %v498
        %594 = vst.msk [vmem:[%s218 + $0x88] sm:$0xff] %vm576, %v503
        %595 = vst.msk [vmem:[%s218 + $0x90] sm:$0xff] %vm576, %v508
        %596 = vst.msk [vmem:[%s218 + $0x98] sm:$0xff] %vm576, %v513
        %597 = vst.msk [vmem:[%s218 + $0xa0] sm:$0xff] %vm576, %v518
        %598 = vst.msk [vmem:[%s218 + $0xa8] sm:$0xff] %vm576, %v523
        %599 = vst.msk [vmem:[%s218 + $0xb0] sm:$0xff] %vm576, %v528
        %600 = vst.msk [vmem:[%s218 + $0xb8] sm:$0xff] %vm576, %v533
        %601 = vst.msk [vmem:[%s218 + $0xc0] sm:$0xff] %vm576, %v538
        %602 = vst.msk [vmem:[%s218 + $0xc8] sm:$0xff] %vm576, %v543
        %603 = vst.msk [vmem:[%s218 + $0xd0] sm:$0xff] %vm576, %v548
        %604 = vst.msk [vmem:[%s218 + $0xd8] sm:$0xff] %vm576, %v553
        %605 = vst.msk [vmem:[%s218 + $0xe0] sm:$0xff] %vm576, %v558
        %606 = vst.msk [vmem:[%s218 + $0xe8] sm:$0xff] %vm576, %v563
        %607 = vst.msk [vmem:[%s218 + $0xf0] sm:$0xff] %vm576, %v568
        %608 = vst.msk [vmem:[%s218 + $0xf8] sm:$0xff] %vm576, %v573
        %v609 = vsel %vm576, %v418, 0.0
        %v610 = vsel %vm576, %v423, 0.0
        %v611 = vadd.f32 %v609, %v610
        %v612 = vsel %vm576, %v428, 0.0
        %v613 = vadd.f32 %v611, %v612
        %v614 = vsel %vm576, %v433, 0.0
        %v615 = vadd.f32 %v613, %v614
        %v616 = vsel %vm576, %v438, 0.0
        %v617 = vadd.f32 %v615, %v616
        %v618 = vsel %vm576, %v443, 0.0
        %v619 = vadd.f32 %v617, %v618
        %v620 = vsel %vm576, %v448, 0.0
        %v621 = vadd.f32 %v619, %v620
        %v622 = vsel %vm576, %v453, 0.0
        %v623 = vadd.f32 %v621, %v622
        %v624 = vsel %vm576, %v458, 0.0
        %v625 = vadd.f32 %v623, %v624
        %v626 = vsel %vm576, %v463, 0.0
        %v627 = vadd.f32 %v625, %v626
        %v628 = vsel %vm576, %v468, 0.0
        %v629 = vadd.f32 %v627, %v628
        %v630 = vsel %vm576, %v473, 0.0
        %v631 = vadd.f32 %v629, %v630
        %v632 = vsel %vm576, %v478, 0.0
        %v633 = vadd.f32 %v631, %v632
        %v634 = vsel %vm576, %v483, 0.0
        %v635 = vadd.f32 %v633, %v634
        %v636 = vsel %vm576, %v488, 0.0
        %v637 = vadd.f32 %v635, %v636
        %v638 = vsel %vm576, %v493, 0.0
        %v639 = vadd.f32 %v637, %v638
        %v640 = vsel %vm576, %v498, 0.0
        %v641 = vadd.f32 %v639, %v640
        %v642 = vsel %vm576, %v503, 0.0
        %v643 = vadd.f32 %v641, %v642
        %v644 = vsel %vm576, %v508, 0.0
        %v645 = vadd.f32 %v643, %v644
        %v646 = vsel %vm576, %v513, 0.0
        %v647 = vadd.f32 %v645, %v646
        %v648 = vsel %vm576, %v518, 0.0
        %v649 = vadd.f32 %v647, %v648
        %v650 = vsel %vm576, %v523, 0.0
        %v651 = vadd.f32 %v649, %v650
        %v652 = vsel %vm576, %v528, 0.0
        %v653 = vadd.f32 %v651, %v652
        %v654 = vsel %vm576, %v533, 0.0
        %v655 = vadd.f32 %v653, %v654
        %v656 = vsel %vm576, %v538, 0.0
        %v657 = vadd.f32 %v655, %v656
        %v658 = vsel %vm576, %v543, 0.0
        %v659 = vadd.f32 %v657, %v658
        %v660 = vsel %vm576, %v548, 0.0
        %v661 = vadd.f32 %v659, %v660
        %v662 = vsel %vm576, %v553, 0.0
        %v663 = vadd.f32 %v661, %v662
        %v664 = vsel %vm576, %v558, 0.0
        %v665 = vadd.f32 %v663, %v664
        %v666 = vsel %vm576, %v563, 0.0
        %v667 = vadd.f32 %v665, %v666
        %v668 = vsel %vm576, %v568, 0.0
        %v669 = vadd.f32 %v667, %v668
        %v670 = vsel %vm576, %v573, 0.0
        %v671 = vadd.f32 %v669, %v670
        %v672 = vrot.slane %v671, 4
        %v673 = vadd.f32 %v671, %v672
        %v674 = vrot.slane %v673, 2
        %v675 = vadd.f32 %v673, %v674
        %v676 = vrot.slane %v675, 1
        %v677 = vadd.f32 %v675, %v676
        %vm678 = vcmask 24576
        %679 = vst.msk [vmem:[%s201] sm:$0x1] %vm678, %v677
        %v680 = vmul.f32 %v418, %v418
        %v681 = vmul.f32 %v423, %v423
        %v682 = vmul.f32 %v428, %v428
        %v683 = vmul.f32 %v433, %v433
        %v684 = vmul.f32 %v438, %v438
        %v685 = vmul.f32 %v443, %v443
        %v686 = vmul.f32 %v448, %v448
        %v687 = vmul.f32 %v453, %v453
        %v688 = vmul.f32 %v458, %v458
        %v689 = vmul.f32 %v463, %v463
        %v690 = vmul.f32 %v468, %v468
        %v691 = vmul.f32 %v473, %v473
        %v692 = vmul.f32 %v478, %v478
        %v693 = vmul.f32 %v483, %v483
        %v694 = vmul.f32 %v488, %v488
        %v695 = vmul.f32 %v493, %v493
        %v696 = vmul.f32 %v498, %v498
        %v697 = vmul.f32 %v503, %v503
        %v698 = vmul.f32 %v508, %v508
        %v699 = vmul.f32 %v513, %v513
        %v700 = vmul.f32 %v518, %v518
        %v701 = vmul.f32 %v523, %v523
        %v702 = vmul.f32 %v528, %v528
        %v703 = vmul.f32 %v533, %v533
        %v704 = vmul.f32 %v538, %v538
        %v705 = vmul.f32 %v543, %v543
        %v706 = vmul.f32 %v548, %v548
        %v707 = vmul.f32 %v553, %v553
        %v708 = vmul.f32 %v558, %v558
        %v709 = vmul.f32 %v563, %v563
        %v710 = vmul.f32 %v568, %v568
        %v711 = vmul.f32 %v573, %v573
        %v712 = vsel %vm576, %v680, 0.0
        %v713 = vsel %vm576, %v681, 0.0
        %v714 = vadd.f32 %v712, %v713
        %v715 = vsel %vm576, %v682, 0.0
        %v716 = vadd.f32 %v714, %v715
        %v717 = vsel %vm576, %v683, 0.0
        %v718 = vadd.f32 %v716, %v717
        %v719 = vsel %vm576, %v684, 0.0
        %v720 = vadd.f32 %v718, %v719
        %v721 = vsel %vm576, %v685, 0.0
        %v722 = vadd.f32 %v720, %v721
        %v723 = vsel %vm576, %v686, 0.0
        %v724 = vadd.f32 %v722, %v723
        %v725 = vsel %vm576, %v687, 0.0
        %v726 = vadd.f32 %v724, %v725
        %v727 = vsel %vm576, %v688, 0.0
        %v728 = vadd.f32 %v726, %v727
        %v729 = vsel %vm576, %v689, 0.0
        %v730 = vadd.f32 %v728, %v729
        %v731 = vsel %vm576, %v690, 0.0
        %v732 = vadd.f32 %v730, %v731
        %v733 = vsel %vm576, %v691, 0.0
        %v734 = vadd.f32 %v732, %v733
        %v735 = vsel %vm576, %v692, 0.0
        %v736 = vadd.f32 %v734, %v735
        %v737 = vsel %vm576, %v693, 0.0
        %v738 = vadd.f32 %v736, %v737
        %v739 = vsel %vm576, %v694, 0.0
        %v740 = vadd.f32 %v738, %v739
        %v741 = vsel %vm576, %v695, 0.0
        %v742 = vadd.f32 %v740, %v741
        %v743 = vsel %vm576, %v696, 0.0
        %v744 = vadd.f32 %v742, %v743
        %v745 = vsel %vm576, %v697, 0.0
        %v746 = vadd.f32 %v744, %v745
        %v747 = vsel %vm576, %v698, 0.0
        %v748 = vadd.f32 %v746, %v747
        %v749 = vsel %vm576, %v699, 0.0
        %v750 = vadd.f32 %v748, %v749
        %v751 = vsel %vm576, %v700, 0.0
        %v752 = vadd.f32 %v750, %v751
        %v753 = vsel %vm576, %v701, 0.0
        %v754 = vadd.f32 %v752, %v753
        %v755 = vsel %vm576, %v702, 0.0
        %v756 = vadd.f32 %v754, %v755
        %v757 = vsel %vm576, %v703, 0.0
        %v758 = vadd.f32 %v756, %v757
        %v759 = vsel %vm576, %v704, 0.0
        %v760 = vadd.f32 %v758, %v759
        %v761 = vsel %vm576, %v705, 0.0
        %v762 = vadd.f32 %v760, %v761
        %v763 = vsel %vm576, %v706, 0.0
        %v764 = vadd.f32 %v762, %v763
        %v765 = vsel %vm576, %v707, 0.0
        %v766 = vadd.f32 %v764, %v765
        %v767 = vsel %vm576, %v708, 0.0
        %v768 = vadd.f32 %v766, %v767
        %v769 = vsel %vm576, %v709, 0.0
        %v770 = vadd.f32 %v768, %v769
        %v771 = vsel %vm576, %v710, 0.0
        %v772 = vadd.f32 %v770, %v771
        %v773 = vsel %vm576, %v711, 0.0
        %v774 = vadd.f32 %v772, %v773
        %v775 = vrot.slane %v774, 4
        %v776 = vadd.f32 %v774, %v775
        %v777 = vrot.slane %v776, 2
        %v778 = vadd.f32 %v776, %v777
        %v779 = vrot.slane %v778, 1
        %v780 = vadd.f32 %v778, %v779
        %781 = vst.msk [vmem:[%s207] sm:$0x1] %vm678, %v780
        %s782 = smul.u32 32, %s22
        %p783 = scmp.lt.s32.totalorder %s782, 63
        %s784 = scalar_select %p783, %s782, 63
        %s785 = smul.addr %s784, 8
        %s786 = scalar_lea.vmem %s2, %s785
        %s787 = sand.u32 %s103, 1
        %s788 = scalar_lea.sflag [#allocation3], %s787
        %s789 = sand.u32 %s103, 1
        %s790 = scalar_lea.vmem [#allocation2], %s789
        %s791 = sand.u32 %s129, 1
        %s792 = scalar_lea.sflag [#allocation5], %s791
        %s793 = sand.u32 %s129, 1
        %s794 = scalar_lea.vmem [#allocation4], %s793
        // Predicated region
        $region29: #{tpu_custom_call.1} parent=27 // pred_check
          %p795 = pneg %p87
        $region30: #{tpu_custom_call.1} parent=27 // pred_check_branch
          %797 = sbr.rel (%p795) target = $region32
        $region31: #{tpu_custom_call.1} parent=27 // pred_region
          %s798 = smul.u32 32, %s22
        $region32: #{tpu_custom_call.1} parent=27 // pred_fallthru
          _
        // Predicated region
        $region33: #{tpu_custom_call.1} parent=27 // pred_check
          %p799 = pneg %p113
        $region34: #{tpu_custom_call.1} parent=27 // pred_check_branch
          %801 = sbr.rel (%p799) target = $region36
        $region35: #{tpu_custom_call.1} parent=27 // pred_region
          %s803 = ssub.s32 16, 16
          %804 = vsyncadd %s788, %s803
          %s805 = smul.addr %s22, 16
          %s806 = scalar_lea.hbm %s3, %s805
          %s808 = sshll.u32 %s790, 4
          %s809 = int_to_ptr.vmem [resolvable:$true] %s808
          %811 = dma.vmem_to_hbm [thread:$0]  %s809, 16, %s806, %s788
        $region36: #{tpu_custom_call.1} parent=27 // pred_fallthru
          _
        // Predicated region
        $region37: #{tpu_custom_call.1} parent=27 // pred_check
          %p812 = pneg %p139
        $region38: #{tpu_custom_call.1} parent=27 // pred_check_branch
          %814 = sbr.rel (%p812) target = $region40
        $region39: #{tpu_custom_call.1} parent=27 // pred_region
          %s816 = ssub.s32 16, 16
          %817 = vsyncadd %s792, %s816
          %s818 = smul.addr %s22, 16
          %s819 = scalar_lea.hbm %s4, %s818
          %s821 = sshll.u32 %s794, 4
          %s822 = int_to_ptr.vmem [resolvable:$true] %s821
          %824 = dma.vmem_to_hbm [thread:$0]  %s822, 16, %s819, %s792
        $region40: #{tpu_custom_call.1} parent=27 // pred_fallthru
          _
      $region28: #{tpu_custom_call.1} parent=5 // pred_fallthru
        _
      %p825 = scmp.le.s32.totalorder 2, %s17
      // Predicated region
      $region41: #{tpu_custom_call.1} parent=5 // pred_check
        %p826 = pneg %p825
      $region42: #{tpu_custom_call.1} parent=5 // pred_check_branch
        %828 = sbr.rel (%p826) target = $region44
      $region43: #{tpu_custom_call.1} parent=5 // pred_region
        %s829 = ssub.s32 %s17, 2
        // Predicated region
        $region45: #{tpu_custom_call.1} parent=43 // pred_check
          %p830 = pneg %p93
        $region46: #{tpu_custom_call.1} parent=43 // pred_check_branch
          %832 = sbr.rel (%p830) target = $region48
        $region47: #{tpu_custom_call.1} parent=43 // pred_region
          %s833 = smul.u32 32, %s23
          %p834 = scmp.lt.s32.totalorder %s833, 63
          %s835 = scalar_select %p834, %s833, 63
          %s836 = smul.addr %s835, 8
          %s837 = scalar_lea.vmem %s2, %s836
        $region48: #{tpu_custom_call.1} parent=43 // pred_fallthru
          _
        // Predicated region
        $region49: #{tpu_custom_call.1} parent=43 // pred_check
          %p838 = pneg %p119
        $region50: #{tpu_custom_call.1} parent=43 // pred_check_branch
          %840 = sbr.rel (%p838) target = $region52
        $region51: #{tpu_custom_call.1} parent=43 // pred_region
          %s841 = sand.u32 %s104, 1
          %s842 = scalar_lea.sflag [#allocation3], %s841
          %s843 = sand.u32 %s104, 1
          %s844 = scalar_lea.vmem [#allocation2], %s843
          %845 = dma.done %s842, 16
        $region52: #{tpu_custom_call.1} parent=43 // pred_fallthru
          _
        // Predicated region
        $region53: #{tpu_custom_call.1} parent=43 // pred_check
          %p846 = pneg %p145
        $region54: #{tpu_custom_call.1} parent=43 // pred_check_branch
          %848 = sbr.rel (%p846) target = $region56
        $region55: #{tpu_custom_call.1} parent=43 // pred_region
          %s849 = sand.u32 %s130, 1
          %s850 = scalar_lea.sflag [#allocation5], %s849
          %s851 = sand.u32 %s130, 1
          %s852 = scalar_lea.vmem [#allocation4], %s851
          %853 = dma.done %s850, 16
        $region56: #{tpu_custom_call.1} parent=43 // pred_fallthru
          _
      $region44: #{tpu_custom_call.1} parent=5 // pred_fallthru
        _
    $region6: #{tpu_custom_call.1} parent=1 // loop_footer
      %s21 = sadd.s32 1, %s17
    $region7: #{tpu_custom_call.1} parent=1 // loop_footer_branch
      %16 = sbr.rel target = $region3
    $region8: #{tpu_custom_call.1} parent=1 // loop_exit
      _
    %854 = vsyncpa [#allocation3], 1
    %s855 = scalar_lea.sflag [#allocation3], 1
    %856 = vsyncpa %s855, 1
    %857 = vsyncpa [#allocation5], 1
    %s858 = scalar_lea.sflag [#allocation5], 1
    %859 = vsyncpa %s858, 1

</llo_original>
